<compile_context>
chip_gen: v7x
topology: tpu7x:2x2x1
jax: 0.10.0
libtpu: 0.0.40
codegen_flags: <defaults>
</compile_context>

<pallas_src>
import functools

import jax
import jax.numpy as jnp
from jax.experimental import pallas as pl
from jax.experimental.pallas import tpu as pltpu

# ---- state_dim (module config) ------------------------------------------------
STATE_DIM = {"waypoints": 10, "companion_vehicle": 6, "light": 3}
WP = STATE_DIM["waypoints"]                 # 10
VEH = STATE_DIM["companion_vehicle"] * 2    # 12
LIGHT = STATE_DIM["light"]                  # 3
D_IN = WP + VEH + LIGHT                     # 25
H_LANE, H_VEH, H_LIGHT, H_OUT = 32, 64, 32, 64
H_CAT = H_LANE + H_VEH + H_LIGHT            # 128

PACK = 2                                    # logical rows packed per lane row
D_IN_P = PACK * D_IN                        # 50
H_CAT_P = PACK * H_CAT                      # 256
H_OUT_P = PACK * H_OUT                      # 128  (lane-dense output width)

_MIN_SPLIT_PAIRS = 1024                     # split grid into >=2 steps past this


def _round_up(a, b):
    return ((a + b - 1) // b) * b


def _cdiv(a, b):
    return (a + b - 1) // b


# ---- kernel -------------------------------------------------------------------
def veh_lane_encoder_kernel(x_ref, we_ref, be_ref, wa_ref, ba_ref, o_ref):
    # x_ref  : (TP, 50)   two logical rows packed per physical row
    # we_ref : (50, 256)  2-way block diagonal of the fused encoder weight
    # be_ref : (1, 256)
    # wa_ref : (256, 128) 2-way block diagonal of the agg weight
    # ba_ref : (1, 128)
    # o_ref  : (TP, 128)  lane-dense packed output (f32 or bf16)
    x = x_ref[...]
    enc = jnp.dot(x, we_ref[...], preferred_element_type=jnp.float32) + be_ref[...]
    enc = jnp.maximum(enc, 0.0)
    out = jnp.dot(enc, wa_ref[...], preferred_element_type=jnp.float32) + ba_ref[...]
    o_ref[...] = jnp.maximum(out, 0.0).astype(o_ref.dtype)


# ---- parameter fusion (call ONCE at parameter-load time) ----------------------
def fuse_params(params):
    """Layout-only fusion of the four Linear layers into two fused weights."""
    wl, bl = params["wl"], params["bl"]     # (10,32), (1,32)
    wv, bv = params["wv"], params["bv"]     # (12,64), (1,64)
    wt, bt = params["wt"], params["bt"]     # (3,32),  (1,32)
    wa, ba = params["wa"], params["ba"]     # (128,64),(1,64)

    # Block-diagonal fused encoder weight: (25, 128)
    w_enc = jnp.zeros((D_IN, H_CAT), jnp.float32)
    w_enc = w_enc.at[:WP, :H_LANE].set(wl)
    w_enc = w_enc.at[WP:WP + VEH, H_LANE:H_LANE + H_VEH].set(wv)
    w_enc = w_enc.at[WP + VEH:, H_LANE + H_VEH:].set(wt)
    b_enc = jnp.concatenate([bl, bv, bt], axis=1)             # (1, 128)

    # Duplicate into a 2-way block diagonal so two logical rows per lane row
    # go through the exact same math.
    w_enc2 = jnp.zeros((D_IN_P, H_CAT_P), jnp.float32)        # (50, 256)
    w_enc2 = w_enc2.at[:D_IN, :H_CAT].set(w_enc)
    w_enc2 = w_enc2.at[D_IN:, H_CAT:].set(w_enc)
    b_enc2 = jnp.concatenate([b_enc, b_enc], axis=1)          # (1, 256)

    w_agg2 = jnp.zeros((H_CAT_P, H_OUT_P), jnp.float32)       # (256, 128)
    w_agg2 = w_agg2.at[:H_CAT, :H_OUT].set(wa)
    w_agg2 = w_agg2.at[H_CAT:, H_OUT:].set(wa)
    b_agg2 = jnp.concatenate([ba, ba], axis=1)                # (1, 128)

    # Materialize once so per-call forwards don't re-run the scatters.
    return tuple(jax.device_put(x) for x in (w_enc2, b_enc2, w_agg2, b_agg2))


# ---- wrapper ------------------------------------------------------------------
@functools.partial(jax.jit, static_argnames=("tile_pairs", "out_dtype"))
def veh_lane_encoder_forward(lane_veh, ego_info, fused_params, *,
                             tile_pairs=8192, out_dtype=jnp.float32):
    """Forward pass matching the PyTorch module (ego_info is unused there too).

    fused_params: output of fuse_params(params), built once at load time.
    out_dtype:    jnp.float32 (exact module semantics) or jnp.bfloat16
                  (~1.5x less HBM traffic; matmuls still accumulate in f32).
    """
    del ego_info
    w_enc2, b_enc2, w_agg2, b_agg2 = fused_params
    B, d_in = lane_veh.shape
    assert d_in == D_IN, f"expected {D_IN} input features, got {d_in}"

    # ---- balanced batch tiling over packed (2-row) rows ----
    half = (B + 1) // 2                       # logical rows / 2, rounded up
    n_tiles = max(1, _cdiv(half, tile_pairs))
    # Give both v7x TensorCores work once the batch is big enough to amortize
    # the extra ~0.35 us grid step; keep the step count even when > 1.
    if n_tiles == 1 and half >= 2 * _MIN_SPLIT_PAIRS:
        n_tiles = 2
    if n_tiles > 1 and n_tiles % 2 == 1:
        n_tiles += 1
    tp = _round_up(_cdiv(half, n_tiles), 8)   # packed rows per grid step (mult of 8)
    half_pad = n_tiles * tp                   # padding bounded to ~8 rows/tile
    b_pad = PACK * half_pad

    x = lane_veh
    if b_pad != B:
        x = jnp.pad(x, ((0, b_pad - B), (0, 0)))
    x_packed = x.reshape(half_pad, D_IN_P)    # free row-major reshape

    out_bytes = jnp.dtype(out_dtype).itemsize
    param_bytes = 4 * (D_IN_P * H_CAT_P + H_CAT_P + H_CAT_P * H_OUT_P + H_OUT_P)

    # Per-step VMEM: x (2-buf) + out (2-buf) + (tp,256) f32 enc temp + weights.
    vmem_need = (2 * tp * D_IN_P * 4
                 + 2 * tp * H_OUT_P * out_bytes
                 + tp * H_CAT_P * 4
                 + param_bytes)
    vmem_limit = min(max(int(vmem_need * 1.25) + (2 << 20), 16 << 20), 48 << 20)

    cost = pl.CostEstimate(
        flops=2 * half_pad * (D_IN_P * H_CAT_P + H_CAT_P * H_OUT_P),
        transcendentals=0,
        bytes_accessed=half_pad * (D_IN_P * 4 + H_OUT_P * out_bytes) + param_bytes,
    )

    const = lambda i: (0, 0)
    # Constant index maps -> weights never re-fetched; single-buffer them.
    wspec = lambda shape: pl.BlockSpec(shape, const, pipeline_mode=pl.Buffered(1))

    out_packed = pl.pallas_call(
        veh_lane_encoder_kernel,
        out_shape=jax.ShapeDtypeStruct((half_pad, H_OUT_P), out_dtype),
        grid=(n_tiles,),
        in_specs=[
            pl.BlockSpec((tp, D_IN_P), lambda i: (i, 0)),     # x tile
            wspec((D_IN_P, H_CAT_P)),                         # fused enc weight
            wspec((1, H_CAT_P)),                              # fused enc bias
            wspec((H_CAT_P, H_OUT_P)),                        # fused agg weight
            wspec((1, H_OUT_P)),                              # fused agg bias
        ],
        out_specs=pl.BlockSpec((tp, H_OUT_P), lambda i: (i, 0)),
        compiler_params=pltpu.CompilerParams(
            dimension_semantics=("parallel",),
            vmem_limit_bytes=vmem_limit,
        ),
        cost_estimate=cost,
    )(x_packed, w_enc2, b_enc2, w_agg2, b_agg2)

    # Unpack lane-dense (half_pad, 128) -> (2*half_pad, 64) and drop padding.
    return out_packed.reshape(b_pad, H_OUT)[:B]


# ---- synthetic params / reference ---------------------------------------------
def init_params(key):
    """Deterministic synthetic parameters matching nn.Linear shapes.

    PyTorch stores weight as (out, in); we store the transpose (in, out).
    Biases are kept 2-D (1, out) for clean broadcasting.
    """
    ks = jax.random.split(key, 8)

    def lin(kw, kb, fan_in, fan_out):
        bound = 1.0 / jnp.sqrt(fan_in)
        w = jax.random.uniform(kw, (fan_in, fan_out), jnp.float32, -bound, bound)
        b = jax.random.uniform(kb, (1, fan_out), jnp.float32, -bound, bound)
        return w, b

    wl, bl = lin(ks[0], ks[1], WP, H_LANE)
    wv, bv = lin(ks[2], ks[3], VEH, H_VEH)
    wt, bt = lin(ks[4], ks[5], LIGHT, H_LIGHT)
    wa, ba = lin(ks[6], ks[7], H_CAT, H_OUT)
    return {"wl": wl, "bl": bl, "wv": wv, "bv": bv,
            "wt": wt, "bt": bt, "wa": wa, "ba": ba}


def reference_forward(lane_veh, params):
    """Pure-JAX reference mirroring the PyTorch module, for verification."""
    lane = lane_veh[:, :WP]
    veh = lane_veh[:, WP:WP + VEH]
    light = lane_veh[:, WP + VEH:]
    lane_enc = jax.nn.relu(lane @ params["wl"] + params["bl"])
    veh_enc = jax.nn.relu(veh @ params["wv"] + params["bv"])
    light_enc = jax.nn.relu(light @ params["wt"] + params["bt"])
    cat = jnp.concatenate([lane_enc, veh_enc, light_enc], axis=1)
    return jax.nn.relu(cat @ params["wa"] + params["ba"])


if __name__ == "__main__":
    key = jax.random.PRNGKey(0)
    k_param, k_x, k_ego = jax.random.split(key, 3)

    params = init_params(k_param)
    fused = fuse_params(params)       # once, at parameter-load time (hoisted)

    # Small demo shapes (also exercises the batch-padding path).
    B = 4
    lane_veh = jax.random.normal(k_x, (B, D_IN), jnp.float32)
    ego_info = jax.random.normal(k_ego, (B, 8), jnp.float32)  # unused by forward

    out = veh_lane_encoder_forward(lane_veh, ego_info, fused)
    out = jax.block_until_ready(out)

    ref = reference_forward(lane_veh, params)
    assert out.shape == (B, H_OUT)
    assert jnp.allclose(out, ref, atol=1e-5, rtol=1e-5)

    # Odd / larger batch sanity check (multi-step grid + balanced tail pad).
    B2 = 37
    x2 = jax.random.normal(jax.random.PRNGKey(7), (B2, D_IN), jnp.float32)
    out2 = jax.block_until_ready(
        veh_lane_encoder_forward(x2, None, fused, tile_pairs=8))
    ref2 = reference_forward(x2, params)
    assert out2.shape == (B2, H_OUT)
    assert jnp.allclose(out2, ref2, atol=1e-5, rtol=1e-5)

    # Optional bf16-output path (halves the dominant HBM store stream).
    out3 = jax.block_until_ready(
        veh_lane_encoder_forward(lane_veh, ego_info, fused,
                                 out_dtype=jnp.bfloat16))
    assert out3.dtype == jnp.bfloat16
    assert jnp.allclose(out3.astype(jnp.float32), ref, atol=2e-2, rtol=2e-2)

    print("KERNEL_OK")
</pallas_src>

<mosaic_0001>
module attributes {stable_mosaic.version = 11 : i64} {
  func.func @veh_lane_encoder_kernel(%arg0: i32, %arg1: memref<8x50xf32, #tpu.memory_space<vmem>>, %arg2: memref<50x256xf32, #tpu.memory_space<vmem>>, %arg3: memref<1x256xf32, #tpu.memory_space<vmem>>, %arg4: memref<256x128xf32, #tpu.memory_space<vmem>>, %arg5: memref<1x128xf32, #tpu.memory_space<vmem>>, %arg6: memref<8x128xf32, #tpu.memory_space<vmem>>) attributes {dimension_semantics = [#tpu.dimension_semantics<parallel>], iteration_bounds = array<i64: 1>, scalar_prefetch = 0 : i64, scratch_operands = 0 : i64, tpu.core_type = #tpu.core_type<tc>, window_params = [{transform_indices = @transform_0, window_bounds = array<i64: 8, 50>}, {pipeline_mode = #tpu.pipeline_mode<synchronous>, transform_indices = @transform_1, window_bounds = array<i64: 50, 256>}, {pipeline_mode = #tpu.pipeline_mode<synchronous>, transform_indices = @transform_2, window_bounds = array<i64: 1, 256>}, {pipeline_mode = #tpu.pipeline_mode<synchronous>, transform_indices = @transform_3, window_bounds = array<i64: 256, 128>}, {pipeline_mode = #tpu.pipeline_mode<synchronous>, transform_indices = @transform_4, window_bounds = array<i64: 1, 128>}, {transform_indices = @transform_5, window_bounds = array<i64: 8, 128>}]} {
    %c0 = arith.constant 0 : index
    %c0_0 = arith.constant 0 : index
    %0 = vector.load %arg1[%c0, %c0_0] : memref<8x50xf32, #tpu.memory_space<vmem>>, vector<8x50xf32>
    %c0_1 = arith.constant 0 : index
    %c0_2 = arith.constant 0 : index
    %1 = vector.load %arg2[%c0_1, %c0_2] : memref<50x256xf32, #tpu.memory_space<vmem>>, vector<50x256xf32>
    %cst = arith.constant dense<0.000000e+00> : vector<8x256xf32>
    %2 = tpu.matmul %0, %1, %cst {dimension_numbers = #tpu.dot_dimension_numbers<[1], [0], [0], [1], [0, 0, 1, 1], [], []>} : vector<8x50xf32>, vector<50x256xf32>, vector<8x256xf32> -> vector<8x256xf32>
    %c0_3 = arith.constant 0 : index
    %c0_4 = arith.constant 0 : index
    %3 = vector.load %arg3[%c0_3, %c0_4] : memref<1x256xf32, #tpu.memory_space<vmem>>, vector<1x256xf32>
    %4 = vector.broadcast %3 : vector<1x256xf32> to vector<8x256xf32>
    %5 = arith.addf %2, %4 : vector<8x256xf32>
    %cst_5 = arith.constant 0.000000e+00 : f32
    %6 = vector.broadcast %cst_5 : f32 to vector<8x256xf32>
    %7 = arith.maximumf %5, %6 : vector<8x256xf32>
    %c0_6 = arith.constant 0 : index
    %c0_7 = arith.constant 0 : index
    %8 = vector.load %arg4[%c0_6, %c0_7] : memref<256x128xf32, #tpu.memory_space<vmem>>, vector<256x128xf32>
    %cst_8 = arith.constant dense<0.000000e+00> : vector<8x128xf32>
    %9 = tpu.matmul %7, %8, %cst_8 {dimension_numbers = #tpu.dot_dimension_numbers<[1], [0], [0], [1], [0, 0, 1, 1], [], []>} : vector<8x256xf32>, vector<256x128xf32>, vector<8x128xf32> -> vector<8x128xf32>
    %c0_9 = arith.constant 0 : index
    %c0_10 = arith.constant 0 : index
    %10 = vector.load %arg5[%c0_9, %c0_10] : memref<1x128xf32, #tpu.memory_space<vmem>>, vector<1x128xf32>
    %11 = vector.broadcast %10 : vector<1x128xf32> to vector<8x128xf32>
    %12 = arith.addf %9, %11 : vector<8x128xf32>
    %cst_11 = arith.constant 0.000000e+00 : f32
    %13 = vector.broadcast %cst_11 : f32 to vector<8x128xf32>
    %14 = arith.maximumf %12, %13 : vector<8x128xf32>
    %c0_12 = arith.constant 0 : index
    %c0_13 = arith.constant 0 : index
    %15 = vector.load %arg6[%c0_12, %c0_13] : memref<8x128xf32, #tpu.memory_space<vmem>>, vector<8x128xf32>
    tpu.vector_store %arg6[%c0_12, %c0_13], %14 {strides = array<i32>} : memref<8x128xf32, #tpu.memory_space<vmem>>, vector<8x128xf32>,
    return
  }
  func.func @transform_0(%arg0: i32) -> (i32, i32) {
    %c0_i32 = arith.constant 0 : i32
    %c0_i32_0 = arith.constant 0 : i32
    return %arg0, %c0_i32 : i32, i32
  }
  func.func @transform_1(%arg0: i32) -> (i32, i32) {
    %c0_i32 = arith.constant 0 : i32
    %c0_i32_0 = arith.constant 0 : i32
    %c0_i32_1 = arith.constant 0 : i32
    return %c0_i32, %c0_i32_0 : i32, i32
  }
  func.func @transform_2(%arg0: i32) -> (i32, i32) {
    %c0_i32 = arith.constant 0 : i32
    %c0_i32_0 = arith.constant 0 : i32
    %c0_i32_1 = arith.constant 0 : i32
    return %c0_i32, %c0_i32_0 : i32, i32
  }
  func.func @transform_3(%arg0: i32) -> (i32, i32) {
    %c0_i32 = arith.constant 0 : i32
    %c0_i32_0 = arith.constant 0 : i32
    %c0_i32_1 = arith.constant 0 : i32
    return %c0_i32, %c0_i32_0 : i32, i32
  }
  func.func @transform_4(%arg0: i32) -> (i32, i32) {
    %c0_i32 = arith.constant 0 : i32
    %c0_i32_0 = arith.constant 0 : i32
    %c0_i32_1 = arith.constant 0 : i32
    return %c0_i32, %c0_i32_0 : i32, i32
  }
  func.func @transform_5(%arg0: i32) -> (i32, i32) {
    %c0_i32 = arith.constant 0 : i32
    %c0_i32_0 = arith.constant 0 : i32
    return %arg0, %c0_i32 : i32, i32
  }
}

</mosaic_0001>

<llo_original>
// kernel: veh_lane_encoder_forward.1
$region0: #{veh_lane_encoder_forward.1}
  #allocation0 [shape = 'u32[]', space=smem, size = 0x4, offset = 0x4, fixed_abs, tag = 'smem constant byte address 0x4 - core index']
  #allocation1 [shape = 'u32[144,128]{1,0:T(1,128)}', space=vmem, size = 0x12000, scoped, tag = 'internal scratch']
  %s0 = inlined_call_operand.vmem [shape: f32[8,50], index: 0, kind: input, shape index: {}]
  %s1 = inlined_call_operand.hbm [shape: f32[50,256], index: 1, kind: input, shape index: {}]
  %s2 = inlined_call_operand.vmem [shape: f32[1,256], index: 2, kind: input, shape index: {}]
  %s3 = inlined_call_operand.hbm [shape: f32[256,128], index: 3, kind: input, shape index: {}]
  %s4 = inlined_call_operand.vmem [shape: f32[1,128], index: 4, kind: input, shape index: {}]
  %s5 = inlined_call_operand.vmem [shape: f32[8,128], index: 5, kind: output, shape index: {}]
  %s6 = sld [smem:[#allocation0]]
  $region38: #{veh_lane_encoder_forward.1} parent=0
    _
  %s8 = ssub.s32 1, %s6
  %s9 = scalar_select 0, %s8, %s6
  $region1: #{veh_lane_encoder_forward.1} parent=0
    #allocation2 [shape = 'u8[57344]{0}', space=vmem, size = 0xe000, scoped, tag = 'input window, operand 1, single buffered']
    #allocation3 [shape = 's32[1]{0}', space=sflag, size = 0x4, scoped, tag = 'scoped memory for veh_lane_encoder_forward.1']
    #allocation4 [shape = 'u8[131072]{0}', space=vmem, size = 0x20000, scoped, tag = 'input window, operand 3, single buffered']
    #allocation5 [shape = 's32[1]{0}', space=sflag, size = 0x4, scoped, tag = 'scoped memory for veh_lane_encoder_forward.1']
    %10 = vsyncpa [#allocation3], 0
    %11 = vsyncpa [#allocation5], 0
    // Predicated region
    $region2: #{veh_lane_encoder_forward.1} parent=1 // pred_check
      _
    $region3: #{veh_lane_encoder_forward.1} parent=1 // pred_check_branch
      %13 = sbr.rel (0) target = $region5
    $region4: #{veh_lane_encoder_forward.1} parent=1 // pred_region
      _
    $region5: #{veh_lane_encoder_forward.1} parent=1 // pred_fallthru
      _
    // Predicated region
    $region6: #{veh_lane_encoder_forward.1} parent=1 // pred_check
      _
    $region7: #{veh_lane_encoder_forward.1} parent=1 // pred_check_branch
      %15 = sbr.rel (0) target = $region9
    $region8: #{veh_lane_encoder_forward.1} parent=1 // pred_region
      %s17 = ssub.s32 1792, 1792
      %18 = vsyncadd [#allocation3], %s17
      %s19 = sshll.u32 [#allocation2], 4
      %s20 = int_to_ptr.vmem [resolvable:$true] %s19
      %25 = dma.hbm_to_vmem [thread:$0]  %s1, 1792, %s20, [#allocation3], 256, 256, 16
    $region9: #{veh_lane_encoder_forward.1} parent=1 // pred_fallthru
      _
    // Predicated region
    $region10: #{veh_lane_encoder_forward.1} parent=1 // pred_check
      _
    $region11: #{veh_lane_encoder_forward.1} parent=1 // pred_check_branch
      %27 = sbr.rel (0) target = $region13
    $region12: #{veh_lane_encoder_forward.1} parent=1 // pred_region
      _
    $region13: #{veh_lane_encoder_forward.1} parent=1 // pred_fallthru
      _
    // Predicated region
    $region14: #{veh_lane_encoder_forward.1} parent=1 // pred_check
      _
    $region15: #{veh_lane_encoder_forward.1} parent=1 // pred_check_branch
      %29 = sbr.rel (0) target = $region17
    $region16: #{veh_lane_encoder_forward.1} parent=1 // pred_region
      %s31 = ssub.s32 4096, 4096
      %32 = vsyncadd [#allocation5], %s31
      %s33 = sshll.u32 [#allocation4], 4
      %s34 = int_to_ptr.vmem [resolvable:$true] %s33
      %39 = dma.hbm_to_vmem [thread:$0]  %s3, 4096, %s34, [#allocation5], 128, 128, 8
    $region17: #{veh_lane_encoder_forward.1} parent=1 // pred_fallthru
      _
    // Predicated region
    $region18: #{veh_lane_encoder_forward.1} parent=1 // pred_check
      _
    $region19: #{veh_lane_encoder_forward.1} parent=1 // pred_check_branch
      %41 = sbr.rel (0) target = $region21
    $region20: #{veh_lane_encoder_forward.1} parent=1 // pred_region
      _
    $region21: #{veh_lane_encoder_forward.1} parent=1 // pred_fallthru
      _
    // Predicated region
    $region22: #{veh_lane_encoder_forward.1} parent=1 // pred_check
      _
    $region23: #{veh_lane_encoder_forward.1} parent=1 // pred_check_branch
      %43 = sbr.rel (0) target = $region25
    $region24: #{veh_lane_encoder_forward.1} parent=1 // pred_region
      %44 = dma.done [#allocation3], 1792
    $region25: #{veh_lane_encoder_forward.1} parent=1 // pred_fallthru
      _
    // Predicated region
    $region26: #{veh_lane_encoder_forward.1} parent=1 // pred_check
      _
    $region27: #{veh_lane_encoder_forward.1} parent=1 // pred_check_branch
      %46 = sbr.rel (0) target = $region29
    $region28: #{veh_lane_encoder_forward.1} parent=1 // pred_region
      %47 = dma.done [#allocation5], 4096
    $region29: #{veh_lane_encoder_forward.1} parent=1 // pred_fallthru
      _
    %v48 = vld [vmem:[%s0] sm:$0xff]
    %v49 = vld [vmem:[#allocation2] sm:$0xff]
    %v50 = vld [vmem:[#allocation2 + $0x8] sm:$0xff]
    %v51 = vld [vmem:[#allocation2 + $0x10] sm:$0xff]
    %v52 = vld [vmem:[#allocation2 + $0x18] sm:$0xff]
    %v53 = vld [vmem:[#allocation2 + $0x20] sm:$0xff]
    %v54 = vld [vmem:[#allocation2 + $0x28] sm:$0xff]
    %v55 = vld [vmem:[#allocation2 + $0x30] sm:$0xff]
    %v56 = vld [vmem:[#allocation2 + $0x38] sm:$0xff]
    %v57 = vld [vmem:[#allocation2 + $0x40] sm:$0xff]
    %v58 = vld [vmem:[#allocation2 + $0x48] sm:$0xff]
    %v59 = vld [vmem:[#allocation2 + $0x50] sm:$0xff]
    %v60 = vld [vmem:[#allocation2 + $0x58] sm:$0xff]
    %v61 = vld [vmem:[#allocation2 + $0x60] sm:$0x3]
    %v62 = vld [vmem:[#allocation2 + $0x68] sm:$0x3]
    %v63 = vld [vmem:[%s2] sm:$0x3]
    %v65 = vlaneseq
    %v66 = vshrl.u32 %v65, 7
    %v67 = vsub.s32 0, %v66
    %v68 = vrot.slane %v63, %v67
    %v69 = vlaneseq
    %v70 = vshrl.u32 %v69, 7
    %v71 = vsub.s32 1, %v70
    %v72 = vrot.slane %v63, %v71
    %vm75 = vcmask 408576
    %v77 = vsel %vm75, %v48, 0
    %vm79 = vcmask 1041408
    %v81 = vsel %vm79, %v61, 0
    %v84 = vsel %vm79, %v62, 0
    %86 = vmatprep.subr.mxu0 %v50
    %87 = vmatpush1.msra.mxu0 %v49
    %88 = vmatprep.subr.mxu0 %v52
    %89 = vmatpush1.msra.mxu0 %v51
    %90 = vmatprep.subr.mxu0 %v54
    %91 = vmatpush1.msra.mxu0 %v53
    %92 = vmatprep.subr.mxu0 %v56
    %93 = vmatpush1.msra.mxu0 %v55
    %94 = vmatprep.subr.mxu0 %v58
    %95 = vmatpush1.msra.mxu0 %v57
    %96 = vmatprep.subr.mxu0 %v60
    %97 = vmatpush1.msra.mxu0 %v59
    %98 = vmatprep.subr.mxu0 %v84
    %99 = vmatpush1.msra.mxu0 %v81
    %100 = vmatprep.subr.mxu0 0.0
    %101 = vmatpush1.msra.mxu0 0.0
    %102 = vmatprep.subr.mxu0 0.0
    %103 = vmatpush1.msra.mxu0 0.0
    %104 = vmatprep.subr.mxu0 0.0
    %105 = vmatpush1.msra.mxu0 0.0
    %106 = vmatprep.subr.mxu0 0.0
    %107 = vmatpush1.msra.mxu0 0.0
    %108 = vmatprep.subr.mxu0 0.0
    %109 = vmatpush1.msra.mxu0 0.0
    %110 = vmatprep.subr.mxu0 0.0
    %111 = vmatpush1.msra.mxu0 0.0
    %112 = vmatprep.subr.mxu0 0.0
    %113 = vmatpush1.msra.mxu0 0.0
    %114 = vmatprep.subr.mxu0 0.0
    %115 = vmatpush1.msra.mxu0 0.0
    %116 = vmatprep.subr.mxu0 0.0
    %117 = vmatpush1.msra.mxu0 0.0
    %118 = vmatprep.subr.mxu0 0.0
    %119 = vmatpush1.msra.mxu0 0.0
    %120 = vmatprep.subr.mxu0 0.0
    %121 = vmatpush1.msra.mxu0 0.0
    %122 = vmatprep.subr.mxu0 0.0
    %123 = vmatpush1.msra.mxu0 0.0
    %124 = vmatprep.subr.mxu0 0.0
    %125 = vmatpush1.msra.mxu0 0.0
    %126 = vmatprep.subr.mxu0 0.0
    %127 = vmatpush1.msra.mxu0 0.0
    %128 = vmatprep.subr.mxu0 0.0
    %129 = vmatpush1.msra.mxu0 0.0
    %130 = vmatprep.subr.mxu0 0.0
    %131 = vmatpush1.msra.mxu0 0.0
    %132 = vmatprep.subr.mxu0 0.0
    %133 = vmatpush1.msra.mxu0 0.0
    %134 = vmatprep.subr.mxu0 0.0
    %135 = vmatpush1.msra.mxu0 0.0
    %136 = vmatprep.subr.mxu0 0.0
    %137 = vmatpush1.msra.mxu0 0.0
    %138 = vmatprep.subr.mxu0 0.0
    %139 = vmatpush1.msra.mxu0 0.0
    %140 = vmatprep.subr.mxu0 0.0
    %141 = vmatpush1.msra.mxu0 0.0
    %142 = vmatprep.subr.mxu0 0.0
    %143 = vmatpush1.msra.mxu0 0.0
    %144 = vmatprep.subr.mxu0 0.0
    %145 = vmatpush1.msra.mxu0 0.0
    %146 = vmatprep.subr.mxu0 0.0
    %147 = vmatpush1.msra.mxu0 0.0
    %148 = vmatprep.subr.mxu0 0.0
    %149 = vmatpush1.msra.mxu0 0.0
    %150 = vmatprep.mubr.f32.mxu0 0.0
    %151 = vmatmul.mubr.f32.gmra.mrb[0].mxu0 %v77
    %v152 = vpop.f32.mrb[0].mxu0
    %v153 = vadd.f32 %v68, %v152
    %v154 = vpop.f32.mrb[0].mxu0
    %v155 = vadd.f32 %v72, %v154
    %156 = vdwg.mxu0
    %v157 = vmax.f32 %v153, 0.0
    %v158 = vmax.f32 %v155, 0.0
    %v159 = vld [vmem:[#allocation4] sm:$0xff]
    %v160 = vld [vmem:[#allocation4 + $0x8] sm:$0xff]
    %v161 = vld [vmem:[#allocation4 + $0x10] sm:$0xff]
    %v162 = vld [vmem:[#allocation4 + $0x18] sm:$0xff]
    %v163 = vld [vmem:[#allocation4 + $0x20] sm:$0xff]
    %v164 = vld [vmem:[#allocation4 + $0x28] sm:$0xff]
    %v165 = vld [vmem:[#allocation4 + $0x30] sm:$0xff]
    %v166 = vld [vmem:[#allocation4 + $0x38] sm:$0xff]
    %v167 = vld [vmem:[#allocation4 + $0x40] sm:$0xff]
    %v168 = vld [vmem:[#allocation4 + $0x48] sm:$0xff]
    %v169 = vld [vmem:[#allocation4 + $0x50] sm:$0xff]
    %v170 = vld [vmem:[#allocation4 + $0x58] sm:$0xff]
    %v171 = vld [vmem:[#allocation4 + $0x60] sm:$0xff]
    %v172 = vld [vmem:[#allocation4 + $0x68] sm:$0xff]
    %v173 = vld [vmem:[#allocation4 + $0x70] sm:$0xff]
    %v174 = vld [vmem:[#allocation4 + $0x78] sm:$0xff]
    %v175 = vld [vmem:[#allocation4 + $0x80] sm:$0xff]
    %v176 = vld [vmem:[#allocation4 + $0x88] sm:$0xff]
    %v177 = vld [vmem:[#allocation4 + $0x90] sm:$0xff]
    %v178 = vld [vmem:[#allocation4 + $0x98] sm:$0xff]
    %v179 = vld [vmem:[#allocation4 + $0xa0] sm:$0xff]
    %v180 = vld [vmem:[#allocation4 + $0xa8] sm:$0xff]
    %v181 = vld [vmem:[#allocation4 + $0xb0] sm:$0xff]
    %v182 = vld [vmem:[#allocation4 + $0xb8] sm:$0xff]
    %v183 = vld [vmem:[#allocation4 + $0xc0] sm:$0xff]
    %v184 = vld [vmem:[#allocation4 + $0xc8] sm:$0xff]
    %v185 = vld [vmem:[#allocation4 + $0xd0] sm:$0xff]
    %v186 = vld [vmem:[#allocation4 + $0xd8] sm:$0xff]
    %v187 = vld [vmem:[#allocation4 + $0xe0] sm:$0xff]
    %v188 = vld [vmem:[#allocation4 + $0xe8] sm:$0xff]
    %v189 = vld [vmem:[#allocation4 + $0xf0] sm:$0xff]
    %v190 = vld [vmem:[#allocation4 + $0xf8] sm:$0xff]
    %v191 = vld [vmem:[%s4] sm:$0x1]
    %v193 = vlaneseq
    %v194 = vshrl.u32 %v193, 7
    %v195 = vsub.s32 0, %v194
    %v196 = vrot.slane %v191, %v195
    %198 = vmatprep.subr.mxu0 0.0
    %199 = vmatpush1.msra.mxu0 %v159
    %200 = vmatprep.subr.mxu0 0.0
    %201 = vmatpush1.msra.mxu0 %v160
    %202 = vmatprep.subr.mxu0 0.0
    %203 = vmatpush1.msra.mxu0 %v161
    %204 = vmatprep.subr.mxu0 0.0
    %205 = vmatpush1.msra.mxu0 %v162
    %206 = vmatprep.subr.mxu0 0.0
    %207 = vmatpush1.msra.mxu0 %v163
    %208 = vmatprep.subr.mxu0 0.0
    %209 = vmatpush1.msra.mxu0 %v164
    %210 = vmatprep.subr.mxu0 0.0
    %211 = vmatpush1.msra.mxu0 %v165
    %212 = vmatprep.subr.mxu0 0.0
    %213 = vmatpush1.msra.mxu0 %v166
    %214 = vmatprep.subr.mxu0 0.0
    %215 = vmatpush1.msra.mxu0 %v167
    %216 = vmatprep.subr.mxu0 0.0
    %217 = vmatpush1.msra.mxu0 %v168
    %218 = vmatprep.subr.mxu0 0.0
    %219 = vmatpush1.msra.mxu0 %v169
    %220 = vmatprep.subr.mxu0 0.0
    %221 = vmatpush1.msra.mxu0 %v170
    %222 = vmatprep.subr.mxu0 0.0
    %223 = vmatpush1.msra.mxu0 %v171
    %224 = vmatprep.subr.mxu0 0.0
    %225 = vmatpush1.msra.mxu0 %v172
    %226 = vmatprep.subr.mxu0 0.0
    %227 = vmatpush1.msra.mxu0 %v173
    %228 = vmatprep.subr.mxu0 0.0
    %229 = vmatpush1.msra.mxu0 %v174
    %230 = vmatprep.subr.mxu0 0.0
    %231 = vmatpush1.msra.mxu0 %v175
    %232 = vmatprep.subr.mxu0 0.0
    %233 = vmatpush1.msra.mxu0 %v176
    %234 = vmatprep.subr.mxu0 0.0
    %235 = vmatpush1.msra.mxu0 %v177
    %236 = vmatprep.subr.mxu0 0.0
    %237 = vmatpush1.msra.mxu0 %v178
    %238 = vmatprep.subr.mxu0 0.0
    %239 = vmatpush1.msra.mxu0 %v179
    %240 = vmatprep.subr.mxu0 0.0
    %241 = vmatpush1.msra.mxu0 %v180
    %242 = vmatprep.subr.mxu0 0.0
    %243 = vmatpush1.msra.mxu0 %v181
    %244 = vmatprep.subr.mxu0 0.0
    %245 = vmatpush1.msra.mxu0 %v182
    %246 = vmatprep.subr.mxu0 0.0
    %247 = vmatpush1.msra.mxu0 %v183
    %248 = vmatprep.subr.mxu0 0.0
    %249 = vmatpush1.msra.mxu0 %v184
    %250 = vmatprep.subr.mxu0 0.0
    %251 = vmatpush1.msra.mxu0 %v185
    %252 = vmatprep.subr.mxu0 0.0
    %253 = vmatpush1.msra.mxu0 %v186
    %254 = vmatprep.subr.mxu0 0.0
    %255 = vmatpush1.msra.mxu0 %v187
    %256 = vmatprep.subr.mxu0 0.0
    %257 = vmatpush1.msra.mxu0 %v188
    %258 = vmatprep.subr.mxu0 0.0
    %259 = vmatpush1.msra.mxu0 %v189
    %260 = vmatprep.subr.mxu0 0.0
    %261 = vmatpush1.msra.mxu0 %v190
    %262 = vmatprep.mubr.f32.mxu0 %v158
    %263 = vmatmul.mubr.f32.gmra.mrb[0].mxu0 %v157
    %v264 = vpop.f32.mrb[0].mxu0
    %v265 = vadd.f32 %v196, %v264
    %v266 = vpop.f32.mrb[0].mxu0
    %267 = vdwg.mxu0
    %v268 = vmax.f32 %v265, 0.0
    %269 = vst [vmem:[%s5] sm:$0xff] %v268
    // Predicated region
    $region30: #{veh_lane_encoder_forward.1} parent=1 // pred_check
      _
    $region31: #{veh_lane_encoder_forward.1} parent=1 // pred_check_branch
      %271 = sbr.rel (0) target = $region33
    $region32: #{veh_lane_encoder_forward.1} parent=1 // pred_region
      _
    $region33: #{veh_lane_encoder_forward.1} parent=1 // pred_fallthru
      _
    // Predicated region
    $region34: #{veh_lane_encoder_forward.1} parent=1 // pred_check
      _
    $region35: #{veh_lane_encoder_forward.1} parent=1 // pred_check_branch
      %273 = sbr.rel (0) target = $region37
    $region36: #{veh_lane_encoder_forward.1} parent=1 // pred_region
      _
    $region37: #{veh_lane_encoder_forward.1} parent=1 // pred_fallthru
      _
    %274 = vsyncpa [#allocation3], 1
    %275 = vsyncpa [#allocation5], 1

</llo_original>
